<compile_context>
chip_gen: v7x
topology: tpu7x:2x2x1
jax: 0.10.0
libtpu: 0.0.40
codegen_flags: <defaults>
</compile_context>

<pallas_src>
from functools import partial

import jax
import jax.numpy as jnp
import numpy as np
from jax.experimental import pallas as pl
from jax.experimental.pallas import tpu as pltpu

BN_EPS = 1e-5

# MXU operand dtype. bf16 operands + f32 accumulation is the recommended fast path on
# v6e/v7x; use jnp.float32 for strict (2e-4-level) agreement with the f32 reference.
MATMUL_DTYPE = jnp.bfloat16
_PRECISION = None if MATMUL_DTYPE == jnp.bfloat16 else jax.lax.Precision.HIGHEST


def resblock_kernel(x_ref, w1_ref, b1_ref, w2_ref, b2_ref, o_ref, pad_ref):
    """Fused ResBlock for n_blk batch elements in one grid step.

    x_ref  : (n_blk, H, W*C) f32   lane-packed input (channel fastest within the last dim)
    w*_ref : (3, W*C, W*C)  bf16   per-dy block-tridiagonal conv weights (BN scale folded)
    b*_ref : (1, W*C)       f32    folded conv-bias + BN shift, tiled over W
    o_ref  : (n_blk, H, W*C) f32   lane-packed output
    pad_ref: (n_blk*(H+2), W*C)    VMEM scratch: stacked per-element blocks with a 1-row
                                   zero halo above and below each element.
    """
    n_blk, H, WC = o_ref.shape
    Hp = H + 2
    M = n_blk * Hp - 2  # matmul rows; includes n_blk-1 unused element-boundary rows

    # Zero only the halo rows (2 per element).  Done unconditionally: it is 2*n_blk tiny
    # stores, and a program_id==0 guard would be wrong on a megacore-sharded grid where
    # each core has its own scratch.  Interior rows are fully overwritten each stage.
    zrow = jnp.zeros((1, WC), pad_ref.dtype)
    for n in range(n_blk):
        pad_ref[pl.ds(n * Hp, 1), :] = zrow
        pad_ref[pl.ds(n * Hp + H + 1, 1), :] = zrow

    def conv3x3(w_ref):
        # acc[n*Hp + h] = conv output row h of element n; rows at element boundaries are
        # garbage but never read back, so one big matmul needs no per-element masking.
        acc = jnp.dot(pad_ref[pl.ds(0, M), :], w_ref[0],
                      preferred_element_type=jnp.float32, precision=_PRECISION)
        for dy in (1, 2):  # unrolled: 3 MXU matmuls, K = N = W*C (=128 at test size)
            acc = acc + jnp.dot(pad_ref[pl.ds(dy, M), :], w_ref[dy],
                                preferred_element_type=jnp.float32, precision=_PRECISION)
        return acc

    # --- stage 1: conv1 + bn1 + relu (halo padding lives entirely in VMEM) ---
    for n in range(n_blk):
        pad_ref[pl.ds(n * Hp + 1, H), :] = x_ref[n].astype(pad_ref.dtype)
    acc1 = conv3x3(w1_ref)
    b1 = b1_ref[...]
    for n in range(n_blk):
        h1 = jnp.maximum(acc1[n * Hp:n * Hp + H] + b1, 0.0)          # f32 epilogue
        pad_ref[pl.ds(n * Hp + 1, H), :] = h1.astype(pad_ref.dtype)  # stage-2 LHS

    # --- stage 2: conv2 + bn2 + residual + relu (residual = still-resident f32 x_ref) ---
    acc2 = conv3x3(w2_ref)
    b2 = b2_ref[...]
    for n in range(n_blk):
        y = acc2[n * Hp:n * Hp + H] + b2 + x_ref[n]
        o_ref[n] = jnp.maximum(y, 0.0)


def pack_conv_bn(w_oihw, b, gamma, beta, mean, var, W):
    """Fold inference-mode BN into the conv and build the per-dy band weight matrices.

    Returns:
      w_band : (3, W*C, W*C) MATMUL_DTYPE. For kernel row dy,
               M[w_in*C+ci, w_out*C+co] = w[co, ci, dy, dx] * scale[co] with
               w_in - w_out = dx - 1 (zero elsewhere), so the dx taps and the zero padding
               along W are folded into a single lane-dense MXU contraction.
      b_pack : (1, W*C) f32 — (b*scale + shift) tiled over W.
    """
    C = w_oihw.shape[0]
    scale = gamma / jnp.sqrt(var + BN_EPS)                              # (C,)
    shift = beta - mean * scale
    w_hwio = jnp.transpose(w_oihw, (2, 3, 1, 0)).astype(jnp.float32)    # (3,3,Cin,Cout)
    w_hwio = w_hwio * scale[None, None, None, :]                        # fold BN scale
    bands = []
    for dy in range(3):
        m = jnp.zeros((W * C, W * C), jnp.float32)
        for dx in range(3):
            sel = jnp.eye(W, k=1 - dx, dtype=jnp.float32)   # selects w_in = w_out + dx - 1
            m = m + jnp.kron(sel, w_hwio[dy, dx])
        bands.append(m)
    w_band = jnp.stack(bands).astype(MATMUL_DTYPE)
    b_pack = jnp.tile((b * scale + shift).astype(jnp.float32), W)[None, :]
    return w_band, b_pack


def prepare_params(params, W):
    """One-time weight prep (called outside the jitted hot path)."""
    w1, b1 = pack_conv_bn(params["w1"], params["b1"], params["bn1_gamma"],
                          params["bn1_beta"], params["bn1_mean"], params["bn1_var"], W)
    w2, b2 = pack_conv_bn(params["w2"], params["b2"], params["bn2_gamma"],
                          params["bn2_beta"], params["bn2_mean"], params["bn2_var"], W)
    return w1, b1, w2, b2


def nchw_to_packed(x_nchw):
    """NCHW -> lane-packed (N, H, W*C); lane index = w*C + c (channel fastest).
    Pay this once at the boundary of a stack of ResBlocks, not per block."""
    N, C, H, W = x_nchw.shape
    return jnp.transpose(x_nchw, (0, 2, 3, 1)).reshape(N, H, W * C).astype(jnp.float32)


def packed_to_nchw(x_packed, C):
    N, H, WC = x_packed.shape
    return jnp.transpose(x_packed.reshape(N, H, WC // C, C), (0, 3, 1, 2))


@partial(jax.jit, static_argnames=("n_blk",))
def res_block_forward_packed(x, w1, b1, w2, b2, n_blk=None):
    """Fused Pallas ResBlock on lane-packed (N, H, W*C) activations (the hot path:
    consecutive ResBlocks chain this function without ever leaving the packed layout)."""
    N, H, WC = x.shape
    if n_blk is None:
        # One grid step per TensorCore: v7x has 2 TCs/chip, v5e/v6e have 1 (single step).
        kind = jax.devices()[0].device_kind.lower()
        cores = 2 if ("v7" in kind or "7x" in kind) else 1
        n_blk = N // cores if (cores > 1 and N % cores == 0) else N
    assert N % n_blk == 0

    return pl.pallas_call(
        resblock_kernel,
        out_shape=jax.ShapeDtypeStruct((N, H, WC), jnp.float32),
        grid=(N // n_blk,),
        in_specs=[
            pl.BlockSpec((n_blk, H, WC), lambda i: (i, 0, 0)),
            # Constant index_maps: the weight/bias blocks are fetched once and revisited
            # (no re-DMA across grid steps); with the default single-step grid this is moot.
            pl.BlockSpec((3, WC, WC), lambda i: (0, 0, 0)),
            pl.BlockSpec((1, WC), lambda i: (0, 0)),
            pl.BlockSpec((3, WC, WC), lambda i: (0, 0, 0)),
            pl.BlockSpec((1, WC), lambda i: (0, 0)),
        ],
        out_specs=pl.BlockSpec((n_blk, H, WC), lambda i: (i, 0, 0)),
        scratch_shapes=[pltpu.VMEM((n_blk * (H + 2), WC), MATMUL_DTYPE)],
        compiler_params=pltpu.CompilerParams(dimension_semantics=("parallel",)),
    )(x, w1, b1, w2, b2)


def reference_forward(x_nchw, params):
    """Pure-JAX reference mirroring the PyTorch ResBlock (BN in inference mode), true f32."""
    def conv(x, w, b):
        y = jax.lax.conv_general_dilated(
            x, w, window_strides=(1, 1), padding=((1, 1), (1, 1)),
            dimension_numbers=("NCHW", "OIHW", "NCHW"),
            precision=jax.lax.Precision.HIGHEST)
        return y + b[None, :, None, None]

    def bn(x, g, be, m, v):
        return (x - m[None, :, None, None]) / jnp.sqrt(v[None, :, None, None] + BN_EPS) \
               * g[None, :, None, None] + be[None, :, None, None]

    residual = x_nchw
    h = jax.nn.relu(bn(conv(x_nchw, params["w1"], params["b1"]),
                       params["bn1_gamma"], params["bn1_beta"],
                       params["bn1_mean"], params["bn1_var"]))
    h = bn(conv(h, params["w2"], params["b2"]),
           params["bn2_gamma"], params["bn2_beta"],
           params["bn2_mean"], params["bn2_var"])
    return jax.nn.relu(h + residual)


def make_params(key, C):
    ks = jax.random.split(key, 10)
    return {
        "w1": jax.random.normal(ks[0], (C, C, 3, 3), jnp.float32) * 0.1,
        "b1": jax.random.normal(ks[1], (C,), jnp.float32) * 0.05,
        "w2": jax.random.normal(ks[2], (C, C, 3, 3), jnp.float32) * 0.1,
        "b2": jax.random.normal(ks[3], (C,), jnp.float32) * 0.05,
        "bn1_gamma": 1.0 + 0.1 * jax.random.normal(ks[4], (C,), jnp.float32),
        "bn1_beta": 0.1 * jax.random.normal(ks[5], (C,), jnp.float32),
        "bn1_mean": 0.1 * jax.random.normal(ks[6], (C,), jnp.float32),
        "bn1_var": 1.0 + 0.1 * jax.nn.softplus(jax.random.normal(ks[7], (C,), jnp.float32)),
        "bn2_gamma": 1.0 + 0.1 * jax.random.normal(ks[8], (C,), jnp.float32),
        "bn2_beta": 0.1 * jax.random.normal(ks[9], (C,), jnp.float32),
        "bn2_mean": jnp.zeros((C,), jnp.float32),
        "bn2_var": jnp.ones((C,), jnp.float32),
    }


if __name__ == "__main__":
    # ResBlock(channels=8) on a 16x16 board: W*C = 128 -> fully lane-dense layout.
    N, C, H, W = 2, 8, 16, 16
    key = jax.random.PRNGKey(0)
    kx, kp = jax.random.split(key)
    x = jax.random.normal(kx, (N, C, H, W), jnp.float32)   # PyTorch NCHW input
    params = make_params(kp, C)

    # One-time prep outside the hot path: fold BN, build bf16 band weights, pack layout.
    w1, b1, w2, b2 = prepare_params(params, W)
    x_packed = nchw_to_packed(x)   # paid once at the edge of a residual tower

    out_packed = res_block_forward_packed(x_packed, w1, b1, w2, b2)
    out_packed = jax.block_until_ready(out_packed)
    out = packed_to_nchw(out_packed, C)   # paid once at the other edge

    ref = reference_forward(x, params)
    # bf16 MXU operands with f32 accumulation introduce ~1e-3 (max ~5e-3) absolute error at
    # these magnitudes — a deliberate precision/perf trade.  Set MATMUL_DTYPE = jnp.float32
    # above for 2e-4-level agreement.
    tol = 2e-2 if MATMUL_DTYPE == jnp.bfloat16 else 2e-4
    np.testing.assert_allclose(np.asarray(out), np.asarray(ref), rtol=tol, atol=tol)
    assert out.shape == (N, C, H, W)

    print("KERNEL_OK")
</pallas_src>

<mosaic_0001>
module attributes {stable_mosaic.version = 11 : i64} {
  func.func @resblock_kernel(%arg0: i32, %arg1: memref<2x16x128xf32, #tpu.memory_space<vmem>>, %arg2: memref<3x128x128xbf16, #tpu.memory_space<vmem>>, %arg3: memref<1x128xf32, #tpu.memory_space<vmem>>, %arg4: memref<3x128x128xbf16, #tpu.memory_space<vmem>>, %arg5: memref<1x128xf32, #tpu.memory_space<vmem>>, %arg6: memref<2x16x128xf32, #tpu.memory_space<vmem>>, %arg7: memref<36x128xbf16, #tpu.memory_space<vmem>>) attributes {dimension_semantics = [#tpu.dimension_semantics<parallel>], iteration_bounds = array<i64: 1>, scalar_prefetch = 0 : i64, scratch_operands = 1 : i64, tpu.core_type = #tpu.core_type<tc>, window_params = [{transform_indices = @transform_0, window_bounds = array<i64: 2, 16, 128>}, {pipeline_mode = #tpu.pipeline_mode<synchronous>, transform_indices = @transform_1, window_bounds = array<i64: 3, 128, 128>}, {pipeline_mode = #tpu.pipeline_mode<synchronous>, transform_indices = @transform_2, window_bounds = array<i64: 1, 128>}, {pipeline_mode = #tpu.pipeline_mode<synchronous>, transform_indices = @transform_3, window_bounds = array<i64: 3, 128, 128>}, {pipeline_mode = #tpu.pipeline_mode<synchronous>, transform_indices = @transform_4, window_bounds = array<i64: 1, 128>}, {transform_indices = @transform_5, window_bounds = array<i64: 2, 16, 128>}]} {
    %cst = arith.constant 0.000000e+00 : bf16
    %0 = vector.broadcast %cst : bf16 to vector<1x128xbf16>
    %c0 = arith.constant 0 : index
    %c0_0 = arith.constant 0 : index
    %1 = vector.load %arg7[%c0, %c0_0] : memref<36x128xbf16, #tpu.memory_space<vmem>>, vector<1x128xbf16>
    tpu.vector_store %arg7[%c0, %c0_0], %0 {strides = array<i32>} : memref<36x128xbf16, #tpu.memory_space<vmem>>, vector<1x128xbf16>,
    %c17 = arith.constant 17 : index
    %c0_1 = arith.constant 0 : index
    %2 = vector.load %arg7[%c17, %c0_1] : memref<36x128xbf16, #tpu.memory_space<vmem>>, vector<1x128xbf16>
    tpu.vector_store %arg7[%c17, %c0_1], %0 {strides = array<i32>} : memref<36x128xbf16, #tpu.memory_space<vmem>>, vector<1x128xbf16>,
    %c18 = arith.constant 18 : index
    %c0_2 = arith.constant 0 : index
    %3 = vector.load %arg7[%c18, %c0_2] : memref<36x128xbf16, #tpu.memory_space<vmem>>, vector<1x128xbf16>
    tpu.vector_store %arg7[%c18, %c0_2], %0 {strides = array<i32>} : memref<36x128xbf16, #tpu.memory_space<vmem>>, vector<1x128xbf16>,
    %c35 = arith.constant 35 : index
    %c0_3 = arith.constant 0 : index
    %4 = vector.load %arg7[%c35, %c0_3] : memref<36x128xbf16, #tpu.memory_space<vmem>>, vector<1x128xbf16>
    tpu.vector_store %arg7[%c35, %c0_3], %0 {strides = array<i32>} : memref<36x128xbf16, #tpu.memory_space<vmem>>, vector<1x128xbf16>,
    %c0_4 = arith.constant 0 : index
    %c0_5 = arith.constant 0 : index
    %c0_6 = arith.constant 0 : index
    %5 = vector.load %arg1[%c0_4, %c0_5, %c0_6] : memref<2x16x128xf32, #tpu.memory_space<vmem>>, vector<1x16x128xf32>
    %6 = vector.shape_cast %5 : vector<1x16x128xf32> to vector<16x128xf32>
    %7 = arith.truncf %6 : vector<16x128xf32> to vector<16x128xbf16>
    %c1 = arith.constant 1 : index
    %c0_7 = arith.constant 0 : index
    %8 = vector.load %arg7[%c1, %c0_7] : memref<36x128xbf16, #tpu.memory_space<vmem>>, vector<16x128xbf16>
    tpu.vector_store %arg7[%c1, %c0_7], %7 {strides = array<i32>} : memref<36x128xbf16, #tpu.memory_space<vmem>>, vector<16x128xbf16>,
    %c1_8 = arith.constant 1 : index
    %c0_9 = arith.constant 0 : index
    %c0_10 = arith.constant 0 : index
    %9 = vector.load %arg1[%c1_8, %c0_9, %c0_10] : memref<2x16x128xf32, #tpu.memory_space<vmem>>, vector<1x16x128xf32>
    %10 = vector.shape_cast %9 : vector<1x16x128xf32> to vector<16x128xf32>
    %11 = arith.truncf %10 : vector<16x128xf32> to vector<16x128xbf16>
    %c19 = arith.constant 19 : index
    %c0_11 = arith.constant 0 : index
    %12 = vector.load %arg7[%c19, %c0_11] : memref<36x128xbf16, #tpu.memory_space<vmem>>, vector<16x128xbf16>
    tpu.vector_store %arg7[%c19, %c0_11], %11 {strides = array<i32>} : memref<36x128xbf16, #tpu.memory_space<vmem>>, vector<16x128xbf16>,
    %c0_12 = arith.constant 0 : index
    %c0_13 = arith.constant 0 : index
    %13 = vector.load %arg7[%c0_12, %c0_13] : memref<36x128xbf16, #tpu.memory_space<vmem>>, vector<34x128xbf16>
    %c0_14 = arith.constant 0 : index
    %c0_15 = arith.constant 0 : index
    %c0_16 = arith.constant 0 : index
    %14 = vector.load %arg2[%c0_14, %c0_15, %c0_16] : memref<3x128x128xbf16, #tpu.memory_space<vmem>>, vector<1x128x128xbf16>
    %15 = vector.shape_cast %14 : vector<1x128x128xbf16> to vector<128x128xbf16>
    %cst_17 = arith.constant dense<0.000000e+00> : vector<34x128xf32>
    %16 = tpu.matmul %13, %15, %cst_17 {dimension_numbers = #tpu.dot_dimension_numbers<[1], [0], [0], [1], [0, 0, 1, 1], [], []>} : vector<34x128xbf16>, vector<128x128xbf16>, vector<34x128xf32> -> vector<34x128xf32>
    %c1_18 = arith.constant 1 : index
    %c0_19 = arith.constant 0 : index
    %17 = vector.load %arg7[%c1_18, %c0_19] : memref<36x128xbf16, #tpu.memory_space<vmem>>, vector<34x128xbf16>
    %c1_20 = arith.constant 1 : index
    %c0_21 = arith.constant 0 : index
    %c0_22 = arith.constant 0 : index
    %18 = vector.load %arg2[%c1_20, %c0_21, %c0_22] : memref<3x128x128xbf16, #tpu.memory_space<vmem>>, vector<1x128x128xbf16>
    %19 = vector.shape_cast %18 : vector<1x128x128xbf16> to vector<128x128xbf16>
    %cst_23 = arith.constant dense<0.000000e+00> : vector<34x128xf32>
    %20 = tpu.matmul %17, %19, %cst_23 {dimension_numbers = #tpu.dot_dimension_numbers<[1], [0], [0], [1], [0, 0, 1, 1], [], []>} : vector<34x128xbf16>, vector<128x128xbf16>, vector<34x128xf32> -> vector<34x128xf32>
    %21 = arith.addf %16, %20 : vector<34x128xf32>
    %c2 = arith.constant 2 : index
    %c0_24 = arith.constant 0 : index
    %22 = vector.load %arg7[%c2, %c0_24] : memref<36x128xbf16, #tpu.memory_space<vmem>>, vector<34x128xbf16>
    %c2_25 = arith.constant 2 : index
    %c0_26 = arith.constant 0 : index
    %c0_27 = arith.constant 0 : index
    %23 = vector.load %arg2[%c2_25, %c0_26, %c0_27] : memref<3x128x128xbf16, #tpu.memory_space<vmem>>, vector<1x128x128xbf16>
    %24 = vector.shape_cast %23 : vector<1x128x128xbf16> to vector<128x128xbf16>
    %cst_28 = arith.constant dense<0.000000e+00> : vector<34x128xf32>
    %25 = tpu.matmul %22, %24, %cst_28 {dimension_numbers = #tpu.dot_dimension_numbers<[1], [0], [0], [1], [0, 0, 1, 1], [], []>} : vector<34x128xbf16>, vector<128x128xbf16>, vector<34x128xf32> -> vector<34x128xf32>
    %26 = arith.addf %21, %25 : vector<34x128xf32>
    %c0_29 = arith.constant 0 : index
    %c0_30 = arith.constant 0 : index
    %27 = vector.load %arg3[%c0_29, %c0_30] : memref<1x128xf32, #tpu.memory_space<vmem>>, vector<1x128xf32>
    %28 = vector.extract_strided_slice %26 {offsets = [0, 0], sizes = [16, 128], strides = [1, 1]} : vector<34x128xf32> to vector<16x128xf32>
    %29 = vector.broadcast %27 : vector<1x128xf32> to vector<16x128xf32>
    %30 = arith.addf %28, %29 : vector<16x128xf32>
    %cst_31 = arith.constant 0.000000e+00 : f32
    %31 = vector.broadcast %cst_31 : f32 to vector<16x128xf32>
    %32 = arith.maximumf %30, %31 : vector<16x128xf32>
    %33 = arith.truncf %32 : vector<16x128xf32> to vector<16x128xbf16>
    %c1_32 = arith.constant 1 : index
    %c0_33 = arith.constant 0 : index
    %34 = vector.load %arg7[%c1_32, %c0_33] : memref<36x128xbf16, #tpu.memory_space<vmem>>, vector<16x128xbf16>
    tpu.vector_store %arg7[%c1_32, %c0_33], %33 {strides = array<i32>} : memref<36x128xbf16, #tpu.memory_space<vmem>>, vector<16x128xbf16>,
    %35 = vector.extract_strided_slice %26 {offsets = [18, 0], sizes = [16, 128], strides = [1, 1]} : vector<34x128xf32> to vector<16x128xf32>
    %36 = vector.broadcast %27 : vector<1x128xf32> to vector<16x128xf32>
    %37 = arith.addf %35, %36 : vector<16x128xf32>
    %cst_34 = arith.constant 0.000000e+00 : f32
    %38 = vector.broadcast %cst_34 : f32 to vector<16x128xf32>
    %39 = arith.maximumf %37, %38 : vector<16x128xf32>
    %40 = arith.truncf %39 : vector<16x128xf32> to vector<16x128xbf16>
    %c19_35 = arith.constant 19 : index
    %c0_36 = arith.constant 0 : index
    %41 = vector.load %arg7[%c19_35, %c0_36] : memref<36x128xbf16, #tpu.memory_space<vmem>>, vector<16x128xbf16>
    tpu.vector_store %arg7[%c19_35, %c0_36], %40 {strides = array<i32>} : memref<36x128xbf16, #tpu.memory_space<vmem>>, vector<16x128xbf16>,
    %c0_37 = arith.constant 0 : index
    %c0_38 = arith.constant 0 : index
    %42 = vector.load %arg7[%c0_37, %c0_38] : memref<36x128xbf16, #tpu.memory_space<vmem>>, vector<34x128xbf16>
    %c0_39 = arith.constant 0 : index
    %c0_40 = arith.constant 0 : index
    %c0_41 = arith.constant 0 : index
    %43 = vector.load %arg4[%c0_39, %c0_40, %c0_41] : memref<3x128x128xbf16, #tpu.memory_space<vmem>>, vector<1x128x128xbf16>
    %44 = vector.shape_cast %43 : vector<1x128x128xbf16> to vector<128x128xbf16>
    %cst_42 = arith.constant dense<0.000000e+00> : vector<34x128xf32>
    %45 = tpu.matmul %42, %44, %cst_42 {dimension_numbers = #tpu.dot_dimension_numbers<[1], [0], [0], [1], [0, 0, 1, 1], [], []>} : vector<34x128xbf16>, vector<128x128xbf16>, vector<34x128xf32> -> vector<34x128xf32>
    %c1_43 = arith.constant 1 : index
    %c0_44 = arith.constant 0 : index
    %46 = vector.load %arg7[%c1_43, %c0_44] : memref<36x128xbf16, #tpu.memory_space<vmem>>, vector<34x128xbf16>
    %c1_45 = arith.constant 1 : index
    %c0_46 = arith.constant 0 : index
    %c0_47 = arith.constant 0 : index
    %47 = vector.load %arg4[%c1_45, %c0_46, %c0_47] : memref<3x128x128xbf16, #tpu.memory_space<vmem>>, vector<1x128x128xbf16>
    %48 = vector.shape_cast %47 : vector<1x128x128xbf16> to vector<128x128xbf16>
    %cst_48 = arith.constant dense<0.000000e+00> : vector<34x128xf32>
    %49 = tpu.matmul %46, %48, %cst_48 {dimension_numbers = #tpu.dot_dimension_numbers<[1], [0], [0], [1], [0, 0, 1, 1], [], []>} : vector<34x128xbf16>, vector<128x128xbf16>, vector<34x128xf32> -> vector<34x128xf32>
    %50 = arith.addf %45, %49 : vector<34x128xf32>
    %c2_49 = arith.constant 2 : index
    %c0_50 = arith.constant 0 : index
    %51 = vector.load %arg7[%c2_49, %c0_50] : memref<36x128xbf16, #tpu.memory_space<vmem>>, vector<34x128xbf16>
    %c2_51 = arith.constant 2 : index
    %c0_52 = arith.constant 0 : index
    %c0_53 = arith.constant 0 : index
    %52 = vector.load %arg4[%c2_51, %c0_52, %c0_53] : memref<3x128x128xbf16, #tpu.memory_space<vmem>>, vector<1x128x128xbf16>
    %53 = vector.shape_cast %52 : vector<1x128x128xbf16> to vector<128x128xbf16>
    %cst_54 = arith.constant dense<0.000000e+00> : vector<34x128xf32>
    %54 = tpu.matmul %51, %53, %cst_54 {dimension_numbers = #tpu.dot_dimension_numbers<[1], [0], [0], [1], [0, 0, 1, 1], [], []>} : vector<34x128xbf16>, vector<128x128xbf16>, vector<34x128xf32> -> vector<34x128xf32>
    %55 = arith.addf %50, %54 : vector<34x128xf32>
    %c0_55 = arith.constant 0 : index
    %c0_56 = arith.constant 0 : index
    %56 = vector.load %arg5[%c0_55, %c0_56] : memref<1x128xf32, #tpu.memory_space<vmem>>, vector<1x128xf32>
    %57 = vector.extract_strided_slice %55 {offsets = [0, 0], sizes = [16, 128], strides = [1, 1]} : vector<34x128xf32> to vector<16x128xf32>
    %58 = vector.broadcast %56 : vector<1x128xf32> to vector<16x128xf32>
    %59 = arith.addf %57, %58 : vector<16x128xf32>
    %c0_57 = arith.constant 0 : index
    %c0_58 = arith.constant 0 : index
    %c0_59 = arith.constant 0 : index
    %60 = vector.load %arg1[%c0_57, %c0_58, %c0_59] : memref<2x16x128xf32, #tpu.memory_space<vmem>>, vector<1x16x128xf32>
    %61 = vector.shape_cast %60 : vector<1x16x128xf32> to vector<16x128xf32>
    %62 = arith.addf %59, %61 : vector<16x128xf32>
    %cst_60 = arith.constant 0.000000e+00 : f32
    %63 = vector.broadcast %cst_60 : f32 to vector<16x128xf32>
    %64 = arith.maximumf %62, %63 : vector<16x128xf32>
    %c0_61 = arith.constant 0 : index
    %c0_62 = arith.constant 0 : index
    %c0_63 = arith.constant 0 : index
    %65 = vector.load %arg6[%c0_61, %c0_62, %c0_63] : memref<2x16x128xf32, #tpu.memory_space<vmem>>, vector<1x16x128xf32>
    %66 = vector.shape_cast %65 : vector<1x16x128xf32> to vector<16x128xf32>
    %67 = vector.shape_cast %64 : vector<16x128xf32> to vector<1x16x128xf32>
    tpu.vector_store %arg6[%c0_61, %c0_62, %c0_63], %67 {strides = array<i32>} : memref<2x16x128xf32, #tpu.memory_space<vmem>>, vector<1x16x128xf32>,
    %68 = vector.extract_strided_slice %55 {offsets = [18, 0], sizes = [16, 128], strides = [1, 1]} : vector<34x128xf32> to vector<16x128xf32>
    %69 = vector.broadcast %56 : vector<1x128xf32> to vector<16x128xf32>
    %70 = arith.addf %68, %69 : vector<16x128xf32>
    %c1_64 = arith.constant 1 : index
    %c0_65 = arith.constant 0 : index
    %c0_66 = arith.constant 0 : index
    %71 = vector.load %arg1[%c1_64, %c0_65, %c0_66] : memref<2x16x128xf32, #tpu.memory_space<vmem>>, vector<1x16x128xf32>
    %72 = vector.shape_cast %71 : vector<1x16x128xf32> to vector<16x128xf32>
    %73 = arith.addf %70, %72 : vector<16x128xf32>
    %cst_67 = arith.constant 0.000000e+00 : f32
    %74 = vector.broadcast %cst_67 : f32 to vector<16x128xf32>
    %75 = arith.maximumf %73, %74 : vector<16x128xf32>
    %c1_68 = arith.constant 1 : index
    %c0_69 = arith.constant 0 : index
    %c0_70 = arith.constant 0 : index
    %76 = vector.load %arg6[%c1_68, %c0_69, %c0_70] : memref<2x16x128xf32, #tpu.memory_space<vmem>>, vector<1x16x128xf32>
    %77 = vector.shape_cast %76 : vector<1x16x128xf32> to vector<16x128xf32>
    %78 = vector.shape_cast %75 : vector<16x128xf32> to vector<1x16x128xf32>
    tpu.vector_store %arg6[%c1_68, %c0_69, %c0_70], %78 {strides = array<i32>} : memref<2x16x128xf32, #tpu.memory_space<vmem>>, vector<1x16x128xf32>,
    return
  }
  func.func @transform_0(%arg0: i32) -> (i32, i32, i32) {
    %c0_i32 = arith.constant 0 : i32
    %c0_i32_0 = arith.constant 0 : i32
    %c0_i32_1 = arith.constant 0 : i32
    return %arg0, %c0_i32, %c0_i32_0 : i32, i32, i32
  }
  func.func @transform_1(%arg0: i32) -> (i32, i32, i32) {
    %c0_i32 = arith.constant 0 : i32
    %c0_i32_0 = arith.constant 0 : i32
    %c0_i32_1 = arith.constant 0 : i32
    %c0_i32_2 = arith.constant 0 : i32
    return %c0_i32, %c0_i32_0, %c0_i32_1 : i32, i32, i32
  }
  func.func @transform_2(%arg0: i32) -> (i32, i32) {
    %c0_i32 = arith.constant 0 : i32
    %c0_i32_0 = arith.constant 0 : i32
    %c0_i32_1 = arith.constant 0 : i32
    return %c0_i32, %c0_i32_0 : i32, i32
  }
  func.func @transform_3(%arg0: i32) -> (i32, i32, i32) {
    %c0_i32 = arith.constant 0 : i32
    %c0_i32_0 = arith.constant 0 : i32
    %c0_i32_1 = arith.constant 0 : i32
    %c0_i32_2 = arith.constant 0 : i32
    return %c0_i32, %c0_i32_0, %c0_i32_1 : i32, i32, i32
  }
  func.func @transform_4(%arg0: i32) -> (i32, i32) {
    %c0_i32 = arith.constant 0 : i32
    %c0_i32_0 = arith.constant 0 : i32
    %c0_i32_1 = arith.constant 0 : i32
    return %c0_i32, %c0_i32_0 : i32, i32
  }
  func.func @transform_5(%arg0: i32) -> (i32, i32, i32) {
    %c0_i32 = arith.constant 0 : i32
    %c0_i32_0 = arith.constant 0 : i32
    %c0_i32_1 = arith.constant 0 : i32
    return %arg0, %c0_i32, %c0_i32_0 : i32, i32, i32
  }
}

</mosaic_0001>

<llo_original>
// kernel: res_block_forward_packed.1
$region0: #{res_block_forward_packed.1}
  #allocation0 [shape = 'u32[]', space=smem, size = 0x4, offset = 0x4, fixed_abs, tag = 'smem constant byte address 0x4 - core index']
  #allocation1 [shape = 'u32[144,128]{1,0:T(1,128)}', space=vmem, size = 0x12000, scoped, tag = 'internal scratch']
  #allocation2 [shape = 'bf16[36,128]{1,0:T(8,128)(2,1)}', space=vmem, size = 0x2800, scoped, tag = 'scratch operand']
  %s0 = inlined_call_operand.hbm [shape: f32[2,16,128], index: 0, kind: input, shape index: {}]
  %s1 = inlined_call_operand.hbm [shape: bf16[3,128,128], index: 1, kind: input, shape index: {}]
  %s2 = inlined_call_operand.vmem [shape: f32[1,128], index: 2, kind: input, shape index: {}]
  %s3 = inlined_call_operand.hbm [shape: bf16[3,128,128], index: 3, kind: input, shape index: {}]
  %s4 = inlined_call_operand.vmem [shape: f32[1,128], index: 4, kind: input, shape index: {}]
  %s5 = inlined_call_operand.hbm [shape: f32[2,16,128], index: 5, kind: output, shape index: {}]
  %s6 = sld [smem:[#allocation0]]
  $region42: #{res_block_forward_packed.1} parent=0
    _
  %s8 = ssub.s32 1, %s6
  %s9 = scalar_select 0, %s8, %s6
  $region1: #{res_block_forward_packed.1} parent=0
    #allocation3 [shape = 'u8[16384]{0}', space=vmem, size = 0x4000, scoped, tag = 'input window, operand 0, single buffered']
    #allocation4 [shape = 's32[1]{0}', space=sflag, size = 0x4, scoped, tag = 'scoped memory for res_block_forward_packed.1']
    #allocation5 [shape = 's32[1]{0}', space=sflag, size = 0x4, scoped, tag = 'scoped memory for res_block_forward_packed.1']
    #allocation6 [shape = 'u8[98304]{0}', space=vmem, size = 0x18000, scoped, tag = 'input window, operand 1, single buffered']
    #allocation7 [shape = 's32[1]{0}', space=sflag, size = 0x4, scoped, tag = 'scoped memory for res_block_forward_packed.1']
    #allocation8 [shape = 'u8[98304]{0}', space=vmem, size = 0x18000, scoped, tag = 'input window, operand 3, single buffered']
    #allocation9 [shape = 'u8[16384]{0}', space=vmem, size = 0x4000, scoped, tag = 'output window, operand 0, single buffered']
    %10 = vsyncpa [#allocation4], 0
    %11 = vsyncpa [#allocation7], 0
    %12 = vsyncpa [#allocation5], 0
    // Predicated region
    $region2: #{res_block_forward_packed.1} parent=1 // pred_check
      _
    $region3: #{res_block_forward_packed.1} parent=1 // pred_check_branch
      %14 = sbr.rel (0) target = $region5
    $region4: #{res_block_forward_packed.1} parent=1 // pred_region
      %s16 = ssub.s32 512, 512
      %17 = vsyncadd [#allocation4], %s16
      %s18 = sshll.u32 [#allocation3], 4
      %s19 = int_to_ptr.vmem [resolvable:$true] %s18
      %24 = dma.hbm_to_vmem [thread:$0]  %s0, 512, %s19, [#allocation4], 128, 128, 8
    $region5: #{res_block_forward_packed.1} parent=1 // pred_fallthru
      _
    // Predicated region
    $region6: #{res_block_forward_packed.1} parent=1 // pred_check
      _
    $region7: #{res_block_forward_packed.1} parent=1 // pred_check_branch
      %26 = sbr.rel (0) target = $region9
    $region8: #{res_block_forward_packed.1} parent=1 // pred_region
      %s28 = ssub.s32 3072, 3072
      %29 = vsyncadd [#allocation7], %s28
      %s30 = sshll.u32 [#allocation6], 4
      %s31 = int_to_ptr.vmem [resolvable:$true] %s30
      %36 = dma.hbm_to_vmem [thread:$0]  %s1, 3072, %s31, [#allocation7], 64, 64, 4
    $region9: #{res_block_forward_packed.1} parent=1 // pred_fallthru
      _
    // Predicated region
    $region10: #{res_block_forward_packed.1} parent=1 // pred_check
      _
    $region11: #{res_block_forward_packed.1} parent=1 // pred_check_branch
      %38 = sbr.rel (0) target = $region13
    $region12: #{res_block_forward_packed.1} parent=1 // pred_region
      _
    $region13: #{res_block_forward_packed.1} parent=1 // pred_fallthru
      _
    // Predicated region
    $region14: #{res_block_forward_packed.1} parent=1 // pred_check
      _
    $region15: #{res_block_forward_packed.1} parent=1 // pred_check_branch
      %40 = sbr.rel (0) target = $region17
    $region16: #{res_block_forward_packed.1} parent=1 // pred_region
      %s42 = ssub.s32 3072, 3072
      %43 = vsyncadd [#allocation7], %s42
      %s44 = sshll.u32 [#allocation8], 4
      %s45 = int_to_ptr.vmem [resolvable:$true] %s44
      %50 = dma.hbm_to_vmem [thread:$0]  %s3, 3072, %s45, [#allocation7], 64, 64, 4
    $region17: #{res_block_forward_packed.1} parent=1 // pred_fallthru
      _
    // Predicated region
    $region18: #{res_block_forward_packed.1} parent=1 // pred_check
      _
    $region19: #{res_block_forward_packed.1} parent=1 // pred_check_branch
      %52 = sbr.rel (0) target = $region21
    $region20: #{res_block_forward_packed.1} parent=1 // pred_region
      _
    $region21: #{res_block_forward_packed.1} parent=1 // pred_fallthru
      _
    // Predicated region
    $region22: #{res_block_forward_packed.1} parent=1 // pred_check
      _
    $region23: #{res_block_forward_packed.1} parent=1 // pred_check_branch
      %54 = sbr.rel (0) target = $region25
    $region24: #{res_block_forward_packed.1} parent=1 // pred_region
      %55 = dma.done [#allocation4], 512
    $region25: #{res_block_forward_packed.1} parent=1 // pred_fallthru
      _
    // Predicated region
    $region26: #{res_block_forward_packed.1} parent=1 // pred_check
      _
    $region27: #{res_block_forward_packed.1} parent=1 // pred_check_branch
      %57 = sbr.rel (0) target = $region29
    $region28: #{res_block_forward_packed.1} parent=1 // pred_region
      %58 = dma.done [#allocation7], 3072
    $region29: #{res_block_forward_packed.1} parent=1 // pred_fallthru
      _
    // Predicated region
    $region30: #{res_block_forward_packed.1} parent=1 // pred_check
      _
    $region31: #{res_block_forward_packed.1} parent=1 // pred_check_branch
      %60 = sbr.rel (0) target = $region33
    $region32: #{res_block_forward_packed.1} parent=1 // pred_region
      %61 = dma.done [#allocation7], 3072
    $region33: #{res_block_forward_packed.1} parent=1 // pred_fallthru
      _
    %vm63 = vcmask 1040384
    %vm64 = vsmask.f32 256
    %vm65 = vmand %vm63, %vm64
    %v66 = vld [vmem:[#allocation2] sm:$0x1]
    %v67 = vsel %vm65, 0, %v66
    %68 = vst [vmem:[#allocation2] sm:$0x1] %v67
    %vm69 = vsmask.f32 7938
    %vm70 = vmand %vm63, %vm69
    %v71 = vld [vmem:[#allocation2 + $0x8] sm:$0x1]
    %v72 = vsel %vm70, 0, %v71
    %73 = vst [vmem:[#allocation2 + $0x8] sm:$0x1] %v72
    %vm74 = vcmask 1041409
    %vm75 = vsmask.f32 1280
    %vm76 = vmand %vm74, %vm75
    %v77 = vld [vmem:[#allocation2 + $0x8] sm:$0x2]
    %v78 = vsel %vm76, 0, %v77
    %79 = vst [vmem:[#allocation2 + $0x8] sm:$0x2] %v78
    %vm80 = vsmask.f32 7942
    %vm81 = vmand %vm74, %vm80
    %v82 = vld [vmem:[#allocation2 + $0x10] sm:$0x2]
    %v83 = vsel %vm81, 0, %v82
    %84 = vst [vmem:[#allocation2 + $0x10] sm:$0x2] %v83
    %v85 = vld [vmem:[#allocation3] sm:$0xff]
    %v86 = vld [vmem:[#allocation3 + $0x8] sm:$0xff]
    %v87 = vpack.c.bf16 %v86, %v85
    %v89 = vunpack.c.l.b16 %v87
    %v90 = vunpack.c.h.b16 %v87
    %v91 = vpack.c.b16 %v89, %v89
    %v92 = vpack.c.b16 %v90, %v90
    %vm93 = vsmask.f32 4368
    %vm94 = vmor %vm64, %vm93
    %v96 = vshrl.u32 %v91, 16
    %v98 = vrot.slane %v96, 7
    %v99 = vshll.u32 %v91, 16
    %v101 = vor.u32 %v98, %v99
    %v102 = vrot.slane %v98, 4
    %v104 = vshrl.u32 %v92, 16
    %v106 = vrot.slane %v104, 7
    %v107 = vshll.u32 %v92, 16
    %v109 = vor.u32 %v106, %v107
    %v110 = vsel %vm94, %v102, %v109
    %v111 = vrot.slane %v106, 4
    %vm115 = vcmask 1043456
    %vm116 = vmand %vm115, %vm69
    %v117 = vld [vmem:[#allocation2] sm:$0xf]
    %v118 = vsel %vm116, %v101, %v117
    %119 = vst [vmem:[#allocation2] sm:$0xf] %v118
    %120 = vst [vmem:[#allocation2 + $0x4] sm:$0xf] %v110
    %v121 = vld [vmem:[#allocation2 + $0x8] sm:$0x1]
    %v122 = vsel %vm65, %v111, %v121
    %123 = vst [vmem:[#allocation2 + $0x8] sm:$0x1] %v122
    %s124 = scalar_lea.vmem [#allocation3], 16
    %v125 = vld [vmem:[%s124] sm:$0xff]
    %v126 = vld [vmem:[%s124 + $0x8] sm:$0xff]
    %v127 = vpack.c.bf16 %v126, %v125
    %v129 = vunpack.c.l.b16 %v127
    %v130 = vunpack.c.h.b16 %v127
    %v131 = vpack.c.b16 %v129, %v129
    %v132 = vpack.c.b16 %v130, %v130
    %vm133 = vsmask.f32 5392
    %vm134 = vmor %vm75, %vm133
    %v136 = vshrl.u32 %v131, 16
    %v138 = vrot.slane %v136, 6
    %v139 = vshll.u32 %v131, 16
    %v141 = vrot.slane %v139, 7
    %v142 = vor.u32 %v138, %v141
    %v143 = vrot.slane %v142, 4
    %v145 = vshrl.u32 %v132, 16
    %v147 = vrot.slane %v145, 6
    %v148 = vshll.u32 %v132, 16
    %v150 = vrot.slane %v148, 7
    %v151 = vor.u32 %v147, %v150
    %v152 = vsel %vm134, %v143, %v151
    %v153 = vrot.slane %v151, 4
    %vm157 = vcmask 1043457
    %vm158 = vmand %vm157, %vm80
    %v159 = vld [vmem:[#allocation2 + $0x8] sm:$0xe]
    %v160 = vsel %vm158, %v142, %v159
    %161 = vst [vmem:[#allocation2 + $0x8] sm:$0xe] %v160
    %162 = vst [vmem:[#allocation2 + $0xc] sm:$0xf] %v152
    %vm163 = vcmask 1041408
    %vm164 = vmand %vm163, %vm75
    %v165 = vld [vmem:[#allocation2 + $0x10] sm:$0x3]
    %v166 = vsel %vm164, %v153, %v165
    %167 = vst [vmem:[#allocation2 + $0x10] sm:$0x3] %v166
    %v168 = vld [vmem:[#allocation2] sm:$0xf]
    %v169 = vld [vmem:[#allocation2 + $0x4] sm:$0xf]
    %v170 = vld [vmem:[#allocation2 + $0x8] sm:$0xf]
    %v171 = vld [vmem:[#allocation2 + $0xc] sm:$0xf]
    %v172 = vld [vmem:[#allocation2 + $0x10] sm:$0x1]
    %v173 = vld [vmem:[#allocation6] sm:$0xf]
    %v174 = vld [vmem:[#allocation6 + $0x4] sm:$0xf]
    %v175 = vld [vmem:[#allocation6 + $0x8] sm:$0xf]
    %v176 = vld [vmem:[#allocation6 + $0xc] sm:$0xf]
    %v177 = vld [vmem:[#allocation6 + $0x10] sm:$0xf]
    %v178 = vld [vmem:[#allocation6 + $0x14] sm:$0xf]
    %v179 = vld [vmem:[#allocation6 + $0x18] sm:$0xf]
    %v180 = vld [vmem:[#allocation6 + $0x1c] sm:$0xf]
    %v181 = vld [vmem:[#allocation6 + $0x20] sm:$0xf]
    %v182 = vld [vmem:[#allocation6 + $0x24] sm:$0xf]
    %v183 = vld [vmem:[#allocation6 + $0x28] sm:$0xf]
    %v184 = vld [vmem:[#allocation6 + $0x2c] sm:$0xf]
    %v185 = vld [vmem:[#allocation6 + $0x30] sm:$0xf]
    %v186 = vld [vmem:[#allocation6 + $0x34] sm:$0xf]
    %v187 = vld [vmem:[#allocation6 + $0x38] sm:$0xf]
    %v188 = vld [vmem:[#allocation6 + $0x3c] sm:$0xf]
    %v189 = vld [vmem:[#allocation2 + $0x10] sm:$0x3]
    %s190 = scalar_lea.vmem [#allocation6], 64
    %v191 = vld [vmem:[%s190] sm:$0xf]
    %v192 = vld [vmem:[%s190 + $0x4] sm:$0xf]
    %v193 = vld [vmem:[%s190 + $0x8] sm:$0xf]
    %v194 = vld [vmem:[%s190 + $0xc] sm:$0xf]
    %v195 = vld [vmem:[%s190 + $0x10] sm:$0xf]
    %v196 = vld [vmem:[%s190 + $0x14] sm:$0xf]
    %v197 = vld [vmem:[%s190 + $0x18] sm:$0xf]
    %v198 = vld [vmem:[%s190 + $0x1c] sm:$0xf]
    %v199 = vld [vmem:[%s190 + $0x20] sm:$0xf]
    %v200 = vld [vmem:[%s190 + $0x24] sm:$0xf]
    %v201 = vld [vmem:[%s190 + $0x28] sm:$0xf]
    %v202 = vld [vmem:[%s190 + $0x2c] sm:$0xf]
    %v203 = vld [vmem:[%s190 + $0x30] sm:$0xf]
    %v204 = vld [vmem:[%s190 + $0x34] sm:$0xf]
    %v205 = vld [vmem:[%s190 + $0x38] sm:$0xf]
    %v206 = vld [vmem:[%s190 + $0x3c] sm:$0xf]
    %v212 = vunpack.c.l.b16 %v168
    %v213 = vunpack.c.l.b16 %v169
    %v214 = vunpack.c.l.b16 %v170
    %v215 = vunpack.c.l.b16 %v171
    %v216 = vunpack.c.l.b16 %v189
    %v217 = vpack.c.b16 %v213, %v212
    %v218 = vpack.c.b16 %v215, %v214
    %v219 = vpack.c.b16 %v216, %v216
    %vm220 = vsmask.f32 7424
    %v222 = vshrl.u32 %v217, 16
    %v224 = vshll.u32 %v217, 16
    %v226 = vrot.slane %v224, 1
    %v227 = vor.u32 %v222, %v226
    %v229 = vshll.u32 %v218, 16
    %v231 = vrot.slane %v229, 1
    %v232 = vsel %vm220, %v227, %v231
    %v233 = vshrl.u32 %v218, 16
    %v235 = vor.u32 %v233, %v231
    %v237 = vshll.u32 %v219, 16
    %v239 = vrot.slane %v237, 1
    %v240 = vsel %vm220, %v235, %v239
    %v241 = vshrl.u32 %v219, 16
    %v243 = vor.u32 %v241, %v239
    %v263 = vunpack.c.l.b16 %v191
    %v264 = vunpack.c.l.b16 %v192
    %v265 = vunpack.c.l.b16 %v193
    %v266 = vunpack.c.l.b16 %v194
    %v267 = vunpack.c.l.b16 %v195
    %v268 = vunpack.c.l.b16 %v196
    %v269 = vunpack.c.l.b16 %v197
    %v270 = vunpack.c.l.b16 %v198
    %v271 = vunpack.c.l.b16 %v199
    %v272 = vunpack.c.l.b16 %v200
    %v273 = vunpack.c.l.b16 %v201
    %v274 = vunpack.c.l.b16 %v202
    %v275 = vunpack.c.l.b16 %v203
    %v276 = vunpack.c.l.b16 %v204
    %v277 = vunpack.c.l.b16 %v205
    %v278 = vunpack.c.l.b16 %v206
    %v279 = vpack.c.b16 %v264, %v263
    %v280 = vpack.c.b16 %v266, %v265
    %v281 = vpack.c.b16 %v268, %v267
    %v282 = vpack.c.b16 %v270, %v269
    %v283 = vpack.c.b16 %v272, %v271
    %v284 = vpack.c.b16 %v274, %v273
    %v285 = vpack.c.b16 %v276, %v275
    %v286 = vpack.c.b16 %v278, %v277
    %295 = vmatprep.subr.bf16.mxu0 0
    %296 = vmatpush1.bf16.msra.mxu0 %v279
    %297 = vmatprep.subr.bf16.mxu0 0
    %298 = vmatpush1.bf16.msra.mxu0 %v280
    %299 = vmatprep.subr.bf16.mxu0 0
    %300 = vmatpush1.bf16.msra.mxu0 %v281
    %301 = vmatprep.subr.bf16.mxu0 0
    %302 = vmatpush1.bf16.msra.mxu0 %v282
    %303 = vmatprep.subr.bf16.mxu0 0
    %304 = vmatpush1.bf16.msra.mxu0 %v283
    %305 = vmatprep.subr.bf16.mxu0 0
    %306 = vmatpush1.bf16.msra.mxu0 %v284
    %307 = vmatprep.subr.bf16.mxu0 0
    %308 = vmatpush1.bf16.msra.mxu0 %v285
    %309 = vmatprep.subr.bf16.mxu0 0
    %310 = vmatpush1.bf16.msra.mxu0 %v286
    %311 = vmatprep.subr.bf16.mxu0 0
    %312 = vmatpush1.bf16.msra.mxu0 0
    %313 = vmatprep.subr.bf16.mxu0 0
    %314 = vmatpush1.bf16.msra.mxu0 0
    %315 = vmatprep.subr.bf16.mxu0 0
    %316 = vmatpush1.bf16.msra.mxu0 0
    %317 = vmatprep.subr.bf16.mxu0 0
    %318 = vmatpush1.bf16.msra.mxu0 0
    %319 = vmatprep.subr.bf16.mxu0 0
    %320 = vmatpush1.bf16.msra.mxu0 0
    %321 = vmatprep.subr.bf16.mxu0 0
    %322 = vmatpush1.bf16.msra.mxu0 0
    %323 = vmatprep.subr.bf16.mxu0 0
    %324 = vmatpush1.bf16.msra.mxu0 0
    %325 = vmatprep.subr.bf16.mxu0 0
    %326 = vmatpush1.bf16.msra.mxu0 0
    %327 = vmatprep.mubr.bf16.mxu0 0
    %328 = vmatmul.mubr.bf16.gmra.mrb[0].mxu0 %v232
    %v329 = vpop.f32.mrb[0].mxu0
    %v330 = vadd.f32 0.0, %v329
    %v331 = vpop.f32.mrb[0].mxu0
    %v332 = vpop.f32.mrb[0].mxu0
    %v333 = vadd.f32 0.0, %v332
    %v334 = vpop.f32.mrb[0].mxu0
    %335 = vmatprep.mubr.bf16.mxu0 0
    %336 = vmatmul.mubr.bf16.gmra.mrb[0].mxu0 %v240
    %v337 = vpop.f32.mrb[0].mxu0
    %v338 = vadd.f32 0.0, %v337
    %v339 = vpop.f32.mrb[0].mxu0
    %v340 = vpop.f32.mrb[0].mxu0
    %v341 = vadd.f32 0.0, %v340
    %v342 = vpop.f32.mrb[0].mxu0
    %343 = vmatprep.mubr.bf16.mxu0 0
    %344 = vmatmul.mubr.bf16.gmra.mrb[0].mxu0 %v243
    %v345 = vpop.f32.mrb[0].mxu0
    %v346 = vadd.f32 0.0, %v345
    %v347 = vpop.f32.mrb[0].mxu0
    %v348 = vpop.f32.mrb[0].mxu0
    %v349 = vpop.f32.mrb[0].mxu0
    %350 = vdwg.mxu0
    %v352 = vunpack.c.l.b16 %v172
    %v353 = vpack.c.b16 %v352, %v352
    %v373 = vunpack.c.l.b16 %v173
    %v374 = vunpack.c.l.b16 %v174
    %v375 = vunpack.c.l.b16 %v175
    %v376 = vunpack.c.l.b16 %v176
    %v377 = vunpack.c.l.b16 %v177
    %v378 = vunpack.c.l.b16 %v178
    %v379 = vunpack.c.l.b16 %v179
    %v380 = vunpack.c.l.b16 %v180
    %v381 = vunpack.c.l.b16 %v181
    %v382 = vunpack.c.l.b16 %v182
    %v383 = vunpack.c.l.b16 %v183
    %v384 = vunpack.c.l.b16 %v184
    %v385 = vunpack.c.l.b16 %v185
    %v386 = vunpack.c.l.b16 %v186
    %v387 = vunpack.c.l.b16 %v187
    %v388 = vunpack.c.l.b16 %v188
    %v389 = vpack.c.b16 %v374, %v373
    %v390 = vpack.c.b16 %v376, %v375
    %v391 = vpack.c.b16 %v378, %v377
    %v392 = vpack.c.b16 %v380, %v379
    %v393 = vpack.c.b16 %v382, %v381
    %v394 = vpack.c.b16 %v384, %v383
    %v395 = vpack.c.b16 %v386, %v385
    %v396 = vpack.c.b16 %v388, %v387
    %405 = vmatprep.subr.bf16.mxu0 0
    %406 = vmatpush1.bf16.msra.mxu0 %v389
    %407 = vmatprep.subr.bf16.mxu0 0
    %408 = vmatpush1.bf16.msra.mxu0 %v390
    %409 = vmatprep.subr.bf16.mxu0 0
    %410 = vmatpush1.bf16.msra.mxu0 %v391
    %411 = vmatprep.subr.bf16.mxu0 0
    %412 = vmatpush1.bf16.msra.mxu0 %v392
    %413 = vmatprep.subr.bf16.mxu0 0
    %414 = vmatpush1.bf16.msra.mxu0 %v393
    %415 = vmatprep.subr.bf16.mxu0 0
    %416 = vmatpush1.bf16.msra.mxu0 %v394
    %417 = vmatprep.subr.bf16.mxu0 0
    %418 = vmatpush1.bf16.msra.mxu0 %v395
    %419 = vmatprep.subr.bf16.mxu0 0
    %420 = vmatpush1.bf16.msra.mxu0 %v396
    %421 = vmatprep.subr.bf16.mxu0 0
    %422 = vmatpush1.bf16.msra.mxu0 0
    %423 = vmatprep.subr.bf16.mxu0 0
    %424 = vmatpush1.bf16.msra.mxu0 0
    %425 = vmatprep.subr.bf16.mxu0 0
    %426 = vmatpush1.bf16.msra.mxu0 0
    %427 = vmatprep.subr.bf16.mxu0 0
    %428 = vmatpush1.bf16.msra.mxu0 0
    %429 = vmatprep.subr.bf16.mxu0 0
    %430 = vmatpush1.bf16.msra.mxu0 0
    %431 = vmatprep.subr.bf16.mxu0 0
    %432 = vmatpush1.bf16.msra.mxu0 0
    %433 = vmatprep.subr.bf16.mxu0 0
    %434 = vmatpush1.bf16.msra.mxu0 0
    %435 = vmatprep.subr.bf16.mxu0 0
    %436 = vmatpush1.bf16.msra.mxu0 0
    %437 = vmatprep.mubr.bf16.mxu0 0
    %438 = vmatmul.mubr.bf16.gmra.mrb[0].mxu0 %v217
    %v439 = vpop.f32.mrb[0].mxu0
    %v440 = vadd.f32 %v330, %v439
    %v441 = vpop.f32.mrb[0].mxu0
    %v442 = vpop.f32.mrb[0].mxu0
    %v443 = vadd.f32 %v333, %v442
    %v444 = vpop.f32.mrb[0].mxu0
    %445 = vmatprep.mubr.bf16.mxu0 0
    %446 = vmatmul.mubr.bf16.gmra.mrb[0].mxu0 %v218
    %v447 = vpop.f32.mrb[0].mxu0
    %v448 = vadd.f32 %v338, %v447
    %v449 = vpop.f32.mrb[0].mxu0
    %v450 = vpop.f32.mrb[0].mxu0
    %v451 = vadd.f32 %v341, %v450
    %v452 = vpop.f32.mrb[0].mxu0
    %453 = vmatprep.mubr.bf16.mxu0 0
    %454 = vmatmul.mubr.bf16.gmra.mrb[0].mxu0 %v353
    %v455 = vpop.f32.mrb[0].mxu0
    %v456 = vadd.f32 %v346, %v455
    %v457 = vpop.f32.mrb[0].mxu0
    %v458 = vpop.f32.mrb[0].mxu0
    %v459 = vpop.f32.mrb[0].mxu0
    %460 = vdwg.mxu0
    %v461 = vld [vmem:[#allocation2] sm:$0xe]
    %s462 = scalar_lea.vmem [#allocation6], 128
    %v463 = vld [vmem:[%s462] sm:$0xf]
    %v464 = vld [vmem:[%s462 + $0x4] sm:$0xf]
    %v465 = vld [vmem:[%s462 + $0x8] sm:$0xf]
    %v466 = vld [vmem:[%s462 + $0xc] sm:$0xf]
    %v467 = vld [vmem:[%s462 + $0x10] sm:$0xf]
    %v468 = vld [vmem:[%s462 + $0x14] sm:$0xf]
    %v469 = vld [vmem:[%s462 + $0x18] sm:$0xf]
    %v470 = vld [vmem:[%s462 + $0x1c] sm:$0xf]
    %v471 = vld [vmem:[%s462 + $0x20] sm:$0xf]
    %v472 = vld [vmem:[%s462 + $0x24] sm:$0xf]
    %v473 = vld [vmem:[%s462 + $0x28] sm:$0xf]
    %v474 = vld [vmem:[%s462 + $0x2c] sm:$0xf]
    %v475 = vld [vmem:[%s462 + $0x30] sm:$0xf]
    %v476 = vld [vmem:[%s462 + $0x34] sm:$0xf]
    %v477 = vld [vmem:[%s462 + $0x38] sm:$0xf]
    %v478 = vld [vmem:[%s462 + $0x3c] sm:$0xf]
    %v480 = vunpack.c.l.b16 %v461
    %v481 = vpack.c.b16 %v213, %v480
    %vm482 = vcmask 1046528
    %v483 = vrot.slane %v481, 1
    %v484 = vrot.slane %v218, 1
    %v485 = vsel %vm482, %v483, %v484
    %v486 = vrot.slane %v219, 1
    %v487 = vsel %vm482, %v484, %v486
    %v507 = vunpack.c.l.b16 %v463
    %v508 = vunpack.c.l.b16 %v464
    %v509 = vunpack.c.l.b16 %v465
    %v510 = vunpack.c.l.b16 %v466
    %v511 = vunpack.c.l.b16 %v467
    %v512 = vunpack.c.l.b16 %v468
    %v513 = vunpack.c.l.b16 %v469
    %v514 = vunpack.c.l.b16 %v470
    %v515 = vunpack.c.l.b16 %v471
    %v516 = vunpack.c.l.b16 %v472
    %v517 = vunpack.c.l.b16 %v473
    %v518 = vunpack.c.l.b16 %v474
    %v519 = vunpack.c.l.b16 %v475
    %v520 = vunpack.c.l.b16 %v476
    %v521 = vunpack.c.l.b16 %v477
    %v522 = vunpack.c.l.b16 %v478
    %v523 = vpack.c.b16 %v508, %v507
    %v524 = vpack.c.b16 %v510, %v509
    %v525 = vpack.c.b16 %v512, %v511
    %v526 = vpack.c.b16 %v514, %v513
    %v527 = vpack.c.b16 %v516, %v515
    %v528 = vpack.c.b16 %v518, %v517
    %v529 = vpack.c.b16 %v520, %v519
    %v530 = vpack.c.b16 %v522, %v521
    %539 = vmatprep.subr.bf16.mxu0 0
    %540 = vmatpush1.bf16.msra.mxu0 %v523
    %541 = vmatprep.subr.bf16.mxu0 0
    %542 = vmatpush1.bf16.msra.mxu0 %v524
    %543 = vmatprep.subr.bf16.mxu0 0
    %544 = vmatpush1.bf16.msra.mxu0 %v525
    %545 = vmatprep.subr.bf16.mxu0 0
    %546 = vmatpush1.bf16.msra.mxu0 %v526
    %547 = vmatprep.subr.bf16.mxu0 0
    %548 = vmatpush1.bf16.msra.mxu0 %v527
    %549 = vmatprep.subr.bf16.mxu0 0
    %550 = vmatpush1.bf16.msra.mxu0 %v528
    %551 = vmatprep.subr.bf16.mxu0 0
    %552 = vmatpush1.bf16.msra.mxu0 %v529
    %553 = vmatprep.subr.bf16.mxu0 0
    %554 = vmatpush1.bf16.msra.mxu0 %v530
    %555 = vmatprep.subr.bf16.mxu0 0
    %556 = vmatpush1.bf16.msra.mxu0 0
    %557 = vmatprep.subr.bf16.mxu0 0
    %558 = vmatpush1.bf16.msra.mxu0 0
    %559 = vmatprep.subr.bf16.mxu0 0
    %560 = vmatpush1.bf16.msra.mxu0 0
    %561 = vmatprep.subr.bf16.mxu0 0
    %562 = vmatpush1.bf16.msra.mxu0 0
    %563 = vmatprep.subr.bf16.mxu0 0
    %564 = vmatpush1.bf16.msra.mxu0 0
    %565 = vmatprep.subr.bf16.mxu0 0
    %566 = vmatpush1.bf16.msra.mxu0 0
    %567 = vmatprep.subr.bf16.mxu0 0
    %568 = vmatpush1.bf16.msra.mxu0 0
    %569 = vmatprep.subr.bf16.mxu0 0
    %570 = vmatpush1.bf16.msra.mxu0 0
    %571 = vmatprep.mubr.bf16.mxu0 0
    %572 = vmatmul.mubr.bf16.gmra.mrb[0].mxu0 %v485
    %v573 = vpop.f32.mrb[0].mxu0
    %v574 = vadd.f32 0.0, %v573
    %v575 = vpop.f32.mrb[0].mxu0
    %v576 = vpop.f32.mrb[0].mxu0
    %v577 = vadd.f32 0.0, %v576
    %v578 = vpop.f32.mrb[0].mxu0
    %579 = vmatprep.mubr.bf16.mxu0 0
    %580 = vmatmul.mubr.bf16.gmra.mrb[0].mxu0 %v487
    %v581 = vpop.f32.mrb[0].mxu0
    %v582 = vadd.f32 0.0, %v581
    %v583 = vpop.f32.mrb[0].mxu0
    %v584 = vpop.f32.mrb[0].mxu0
    %v585 = vadd.f32 0.0, %v584
    %v586 = vpop.f32.mrb[0].mxu0
    %587 = vmatprep.mubr.bf16.mxu0 0
    %588 = vmatmul.mubr.bf16.gmra.mrb[0].mxu0 %v486
    %v589 = vpop.f32.mrb[0].mxu0
    %v590 = vadd.f32 0.0, %v589
    %v591 = vpop.f32.mrb[0].mxu0
    %v592 = vpop.f32.mrb[0].mxu0
    %v593 = vpop.f32.mrb[0].mxu0
    %594 = vdwg.mxu0
    %v595 = vadd.f32 %v440, %v574
    %v596 = vadd.f32 %v443, %v577
    %v597 = vadd.f32 %v448, %v582
    %v598 = vadd.f32 %v451, %v585
    %v599 = vadd.f32 %v456, %v590
    %v600 = vld [vmem:[%s2] sm:$0x1]
    %v602 = vlaneseq
    %v603 = vshrl.u32 %v602, 7
    %v604 = vsub.s32 0, %v603
    %v605 = vrot.slane %v600, %v604
    %v607 = vadd.f32 %v595, %v605
    %v608 = vadd.f32 %v596, %v605
    %v609 = vmax.f32 %v607, 0.0
    %v610 = vmax.f32 %v608, 0.0
    %v611 = vpack.c.bf16 %v610, %v609
    %v613 = vunpack.c.l.b16 %v611
    %v614 = vunpack.c.h.b16 %v611
    %v615 = vpack.c.b16 %v613, %v613
    %v616 = vpack.c.b16 %v614, %v614
    %v618 = vshrl.u32 %v615, 16
    %v620 = vrot.slane %v618, 7
    %v621 = vshll.u32 %v615, 16
    %v623 = vor.u32 %v620, %v621
    %v624 = vrot.slane %v620, 4
    %v626 = vshrl.u32 %v616, 16
    %v628 = vrot.slane %v626, 7
    %v629 = vshll.u32 %v616, 16
    %v631 = vor.u32 %v628, %v629
    %v632 = vsel %vm94, %v624, %v631
    %v633 = vrot.slane %v628, 4
    %v637 = vld [vmem:[#allocation2] sm:$0xf]
    %v638 = vsel %vm116, %v623, %v637
    %639 = vst [vmem:[#allocation2] sm:$0xf] %v638
    %640 = vst [vmem:[#allocation2 + $0x4] sm:$0xf] %v632
    %v641 = vld [vmem:[#allocation2 + $0x8] sm:$0x1]
    %v642 = vsel %vm65, %v633, %v641
    %643 = vst [vmem:[#allocation2 + $0x8] sm:$0x1] %v642
    %v644 = vadd.f32 %v597, %v605
    %v645 = vadd.f32 %v598, %v605
    %v646 = vadd.f32 %v599, %v605
    %v647 = vmax.f32 %v644, 0.0
    %v648 = vmax.f32 %v645, 0.0
    %v649 = vmax.f32 %v646, 0.0
    %v650 = vpack.c.bf16 %v648, %v647
    %v651 = vpack.c.bf16 %v649, %v649
    %v654 = vunpack.c.l.b16 %v650
    %v655 = vunpack.c.h.b16 %v650
    %v656 = vunpack.c.l.b16 %v651
    %v657 = vpack.c.b16 %v654, %v654
    %v658 = vpack.c.b16 %v655, %v655
    %v659 = vpack.c.b16 %v656, %v656
    %v661 = vshrl.u32 %v657, 16
    %v663 = vrot.slane %v661, 7
    %v664 = vshll.u32 %v657, 16
    %v666 = vor.u32 %v663, %v664
    %v667 = vrot.slane %v663, 4
    %v669 = vshrl.u32 %v658, 16
    %v671 = vrot.slane %v669, 7
    %v672 = vshll.u32 %v658, 16
    %v674 = vor.u32 %v671, %v672
    %v675 = vsel %vm94, %v667, %v674
    %v676 = vrot.slane %v671, 4
    %v678 = vshrl.u32 %v659, 16
    %v680 = vrot.slane %v678, 7
    %v681 = vshll.u32 %v659, 16
    %v683 = vor.u32 %v680, %v681
    %v684 = vsel %vm94, %v676, %v683
    %v688 = vld [vmem:[#allocation2 + $0x8] sm:$0xe]
    %v689 = vsel %vm158, %v666, %v688
    %690 = vst [vmem:[#allocation2 + $0x8] sm:$0xe] %v689
    %691 = vst [vmem:[#allocation2 + $0xc] sm:$0xf] %v675
    %v692 = vld [vmem:[#allocation2 + $0x10] sm:$0x3]
    %v693 = vsel %vm164, %v684, %v692
    %694 = vst [vmem:[#allocation2 + $0x10] sm:$0x3] %v693
    %v695 = vld [vmem:[#allocation2] sm:$0xf]
    %v696 = vld [vmem:[#allocation2 + $0x4] sm:$0xf]
    %v697 = vld [vmem:[#allocation2 + $0x8] sm:$0xf]
    %v698 = vld [vmem:[#allocation2 + $0xc] sm:$0xf]
    %v699 = vld [vmem:[#allocation2 + $0x10] sm:$0x1]
    %v700 = vld [vmem:[#allocation8] sm:$0xf]
    %v701 = vld [vmem:[#allocation8 + $0x4] sm:$0xf]
    %v702 = vld [vmem:[#allocation8 + $0x8] sm:$0xf]
    %v703 = vld [vmem:[#allocation8 + $0xc] sm:$0xf]
    %v704 = vld [vmem:[#allocation8 + $0x10] sm:$0xf]
    %v705 = vld [vmem:[#allocation8 + $0x14] sm:$0xf]
    %v706 = vld [vmem:[#allocation8 + $0x18] sm:$0xf]
    %v707 = vld [vmem:[#allocation8 + $0x1c] sm:$0xf]
    %v708 = vld [vmem:[#allocation8 + $0x20] sm:$0xf]
    %v709 = vld [vmem:[#allocation8 + $0x24] sm:$0xf]
    %v710 = vld [vmem:[#allocation8 + $0x28] sm:$0xf]
    %v711 = vld [vmem:[#allocation8 + $0x2c] sm:$0xf]
    %v712 = vld [vmem:[#allocation8 + $0x30] sm:$0xf]
    %v713 = vld [vmem:[#allocation8 + $0x34] sm:$0xf]
    %v714 = vld [vmem:[#allocation8 + $0x38] sm:$0xf]
    %v715 = vld [vmem:[#allocation8 + $0x3c] sm:$0xf]
    %v716 = vld [vmem:[#allocation2 + $0x10] sm:$0x3]
    %s717 = scalar_lea.vmem [#allocation8], 64
    %v718 = vld [vmem:[%s717] sm:$0xf]
    %v719 = vld [vmem:[%s717 + $0x4] sm:$0xf]
    %v720 = vld [vmem:[%s717 + $0x8] sm:$0xf]
    %v721 = vld [vmem:[%s717 + $0xc] sm:$0xf]
    %v722 = vld [vmem:[%s717 + $0x10] sm:$0xf]
    %v723 = vld [vmem:[%s717 + $0x14] sm:$0xf]
    %v724 = vld [vmem:[%s717 + $0x18] sm:$0xf]
    %v725 = vld [vmem:[%s717 + $0x1c] sm:$0xf]
    %v726 = vld [vmem:[%s717 + $0x20] sm:$0xf]
    %v727 = vld [vmem:[%s717 + $0x24] sm:$0xf]
    %v728 = vld [vmem:[%s717 + $0x28] sm:$0xf]
    %v729 = vld [vmem:[%s717 + $0x2c] sm:$0xf]
    %v730 = vld [vmem:[%s717 + $0x30] sm:$0xf]
    %v731 = vld [vmem:[%s717 + $0x34] sm:$0xf]
    %v732 = vld [vmem:[%s717 + $0x38] sm:$0xf]
    %v733 = vld [vmem:[%s717 + $0x3c] sm:$0xf]
    %v739 = vunpack.c.l.b16 %v695
    %v740 = vunpack.c.l.b16 %v696
    %v741 = vunpack.c.l.b16 %v697
    %v742 = vunpack.c.l.b16 %v698
    %v743 = vunpack.c.l.b16 %v716
    %v744 = vpack.c.b16 %v740, %v739
    %v745 = vpack.c.b16 %v742, %v741
    %v746 = vpack.c.b16 %v743, %v743
    %v748 = vshrl.u32 %v744, 16
    %v750 = vshll.u32 %v744, 16
    %v752 = vrot.slane %v750, 1
    %v753 = vor.u32 %v748, %v752
    %v755 = vshll.u32 %v745, 16
    %v757 = vrot.slane %v755, 1
    %v758 = vsel %vm220, %v753, %v757
    %v759 = vshrl.u32 %v745, 16
    %v761 = vor.u32 %v759, %v757
    %v763 = vshll.u32 %v746, 16
    %v765 = vrot.slane %v763, 1
    %v766 = vsel %vm220, %v761, %v765
    %v767 = vshrl.u32 %v746, 16
    %v769 = vor.u32 %v767, %v765
    %v789 = vunpack.c.l.b16 %v718
    %v790 = vunpack.c.l.b16 %v719
    %v791 = vunpack.c.l.b16 %v720
    %v792 = vunpack.c.l.b16 %v721
    %v793 = vunpack.c.l.b16 %v722
    %v794 = vunpack.c.l.b16 %v723
    %v795 = vunpack.c.l.b16 %v724
    %v796 = vunpack.c.l.b16 %v725
    %v797 = vunpack.c.l.b16 %v726
    %v798 = vunpack.c.l.b16 %v727
    %v799 = vunpack.c.l.b16 %v728
    %v800 = vunpack.c.l.b16 %v729
    %v801 = vunpack.c.l.b16 %v730
    %v802 = vunpack.c.l.b16 %v731
    %v803 = vunpack.c.l.b16 %v732
    %v804 = vunpack.c.l.b16 %v733
    %v805 = vpack.c.b16 %v790, %v789
    %v806 = vpack.c.b16 %v792, %v791
    %v807 = vpack.c.b16 %v794, %v793
    %v808 = vpack.c.b16 %v796, %v795
    %v809 = vpack.c.b16 %v798, %v797
    %v810 = vpack.c.b16 %v800, %v799
    %v811 = vpack.c.b16 %v802, %v801
    %v812 = vpack.c.b16 %v804, %v803
    %821 = vmatprep.subr.bf16.mxu0 0
    %822 = vmatpush1.bf16.msra.mxu0 %v805
    %823 = vmatprep.subr.bf16.mxu0 0
    %824 = vmatpush1.bf16.msra.mxu0 %v806
    %825 = vmatprep.subr.bf16.mxu0 0
    %826 = vmatpush1.bf16.msra.mxu0 %v807
    %827 = vmatprep.subr.bf16.mxu0 0
    %828 = vmatpush1.bf16.msra.mxu0 %v808
    %829 = vmatprep.subr.bf16.mxu0 0
    %830 = vmatpush1.bf16.msra.mxu0 %v809
    %831 = vmatprep.subr.bf16.mxu0 0
    %832 = vmatpush1.bf16.msra.mxu0 %v810
    %833 = vmatprep.subr.bf16.mxu0 0
    %834 = vmatpush1.bf16.msra.mxu0 %v811
    %835 = vmatprep.subr.bf16.mxu0 0
    %836 = vmatpush1.bf16.msra.mxu0 %v812
    %837 = vmatprep.subr.bf16.mxu0 0
    %838 = vmatpush1.bf16.msra.mxu0 0
    %839 = vmatprep.subr.bf16.mxu0 0
    %840 = vmatpush1.bf16.msra.mxu0 0
    %841 = vmatprep.subr.bf16.mxu0 0
    %842 = vmatpush1.bf16.msra.mxu0 0
    %843 = vmatprep.subr.bf16.mxu0 0
    %844 = vmatpush1.bf16.msra.mxu0 0
    %845 = vmatprep.subr.bf16.mxu0 0
    %846 = vmatpush1.bf16.msra.mxu0 0
    %847 = vmatprep.subr.bf16.mxu0 0
    %848 = vmatpush1.bf16.msra.mxu0 0
    %849 = vmatprep.subr.bf16.mxu0 0
    %850 = vmatpush1.bf16.msra.mxu0 0
    %851 = vmatprep.subr.bf16.mxu0 0
    %852 = vmatpush1.bf16.msra.mxu0 0
    %853 = vmatprep.mubr.bf16.mxu0 0
    %854 = vmatmul.mubr.bf16.gmra.mrb[0].mxu0 %v758
    %v855 = vpop.f32.mrb[0].mxu0
    %v856 = vadd.f32 0.0, %v855
    %v857 = vpop.f32.mrb[0].mxu0
    %v858 = vpop.f32.mrb[0].mxu0
    %v859 = vadd.f32 0.0, %v858
    %v860 = vpop.f32.mrb[0].mxu0
    %861 = vmatprep.mubr.bf16.mxu0 0
    %862 = vmatmul.mubr.bf16.gmra.mrb[0].mxu0 %v766
    %v863 = vpop.f32.mrb[0].mxu0
    %v864 = vadd.f32 0.0, %v863
    %v865 = vpop.f32.mrb[0].mxu0
    %v866 = vpop.f32.mrb[0].mxu0
    %v867 = vadd.f32 0.0, %v866
    %v868 = vpop.f32.mrb[0].mxu0
    %869 = vmatprep.mubr.bf16.mxu0 0
    %870 = vmatmul.mubr.bf16.gmra.mrb[0].mxu0 %v769
    %v871 = vpop.f32.mrb[0].mxu0
    %v872 = vadd.f32 0.0, %v871
    %v873 = vpop.f32.mrb[0].mxu0
    %v874 = vpop.f32.mrb[0].mxu0
    %v875 = vpop.f32.mrb[0].mxu0
    %876 = vdwg.mxu0
    %v878 = vunpack.c.l.b16 %v699
    %v879 = vpack.c.b16 %v878, %v878
    %v899 = vunpack.c.l.b16 %v700
    %v900 = vunpack.c.l.b16 %v701
    %v901 = vunpack.c.l.b16 %v702
    %v902 = vunpack.c.l.b16 %v703
    %v903 = vunpack.c.l.b16 %v704
    %v904 = vunpack.c.l.b16 %v705
    %v905 = vunpack.c.l.b16 %v706
    %v906 = vunpack.c.l.b16 %v707
    %v907 = vunpack.c.l.b16 %v708
    %v908 = vunpack.c.l.b16 %v709
    %v909 = vunpack.c.l.b16 %v710
    %v910 = vunpack.c.l.b16 %v711
    %v911 = vunpack.c.l.b16 %v712
    %v912 = vunpack.c.l.b16 %v713
    %v913 = vunpack.c.l.b16 %v714
    %v914 = vunpack.c.l.b16 %v715
    %v915 = vpack.c.b16 %v900, %v899
    %v916 = vpack.c.b16 %v902, %v901
    %v917 = vpack.c.b16 %v904, %v903
    %v918 = vpack.c.b16 %v906, %v905
    %v919 = vpack.c.b16 %v908, %v907
    %v920 = vpack.c.b16 %v910, %v909
    %v921 = vpack.c.b16 %v912, %v911
    %v922 = vpack.c.b16 %v914, %v913
    %931 = vmatprep.subr.bf16.mxu0 0
    %932 = vmatpush1.bf16.msra.mxu0 %v915
    %933 = vmatprep.subr.bf16.mxu0 0
    %934 = vmatpush1.bf16.msra.mxu0 %v916
    %935 = vmatprep.subr.bf16.mxu0 0
    %936 = vmatpush1.bf16.msra.mxu0 %v917
    %937 = vmatprep.subr.bf16.mxu0 0
    %938 = vmatpush1.bf16.msra.mxu0 %v918
    %939 = vmatprep.subr.bf16.mxu0 0
    %940 = vmatpush1.bf16.msra.mxu0 %v919
    %941 = vmatprep.subr.bf16.mxu0 0
    %942 = vmatpush1.bf16.msra.mxu0 %v920
    %943 = vmatprep.subr.bf16.mxu0 0
    %944 = vmatpush1.bf16.msra.mxu0 %v921
    %945 = vmatprep.subr.bf16.mxu0 0
    %946 = vmatpush1.bf16.msra.mxu0 %v922
    %947 = vmatprep.subr.bf16.mxu0 0
    %948 = vmatpush1.bf16.msra.mxu0 0
    %949 = vmatprep.subr.bf16.mxu0 0
    %950 = vmatpush1.bf16.msra.mxu0 0
    %951 = vmatprep.subr.bf16.mxu0 0
    %952 = vmatpush1.bf16.msra.mxu0 0
    %953 = vmatprep.subr.bf16.mxu0 0
    %954 = vmatpush1.bf16.msra.mxu0 0
    %955 = vmatprep.subr.bf16.mxu0 0
    %956 = vmatpush1.bf16.msra.mxu0 0
    %957 = vmatprep.subr.bf16.mxu0 0
    %958 = vmatpush1.bf16.msra.mxu0 0
    %959 = vmatprep.subr.bf16.mxu0 0
    %960 = vmatpush1.bf16.msra.mxu0 0
    %961 = vmatprep.subr.bf16.mxu0 0
    %962 = vmatpush1.bf16.msra.mxu0 0
    %963 = vmatprep.mubr.bf16.mxu0 0
    %964 = vmatmul.mubr.bf16.gmra.mrb[0].mxu0 %v744
    %v965 = vpop.f32.mrb[0].mxu0
    %v966 = vadd.f32 %v856, %v965
    %v967 = vpop.f32.mrb[0].mxu0
    %v968 = vpop.f32.mrb[0].mxu0
    %v969 = vadd.f32 %v859, %v968
    %v970 = vpop.f32.mrb[0].mxu0
    %971 = vmatprep.mubr.bf16.mxu0 0
    %972 = vmatmul.mubr.bf16.gmra.mrb[0].mxu0 %v745
    %v973 = vpop.f32.mrb[0].mxu0
    %v974 = vadd.f32 %v864, %v973
    %v975 = vpop.f32.mrb[0].mxu0
    %v976 = vpop.f32.mrb[0].mxu0
    %v977 = vadd.f32 %v867, %v976
    %v978 = vpop.f32.mrb[0].mxu0
    %979 = vmatprep.mubr.bf16.mxu0 0
    %980 = vmatmul.mubr.bf16.gmra.mrb[0].mxu0 %v879
    %v981 = vpop.f32.mrb[0].mxu0
    %v982 = vadd.f32 %v872, %v981
    %v983 = vpop.f32.mrb[0].mxu0
    %v984 = vpop.f32.mrb[0].mxu0
    %v985 = vpop.f32.mrb[0].mxu0
    %986 = vdwg.mxu0
    %v987 = vld [vmem:[#allocation2] sm:$0xe]
    %s988 = scalar_lea.vmem [#allocation8], 128
    %v989 = vld [vmem:[%s988] sm:$0xf]
    %v990 = vld [vmem:[%s988 + $0x4] sm:$0xf]
    %v991 = vld [vmem:[%s988 + $0x8] sm:$0xf]
    %v992 = vld [vmem:[%s988 + $0xc] sm:$0xf]
    %v993 = vld [vmem:[%s988 + $0x10] sm:$0xf]
    %v994 = vld [vmem:[%s988 + $0x14] sm:$0xf]
    %v995 = vld [vmem:[%s988 + $0x18] sm:$0xf]
    %v996 = vld [vmem:[%s988 + $0x1c] sm:$0xf]
    %v997 = vld [vmem:[%s988 + $0x20] sm:$0xf]
    %v998 = vld [vmem:[%s988 + $0x24] sm:$0xf]
    %v999 = vld [vmem:[%s988 + $0x28] sm:$0xf]
    %v1000 = vld [vmem:[%s988 + $0x2c] sm:$0xf]
    %v1001 = vld [vmem:[%s988 + $0x30] sm:$0xf]
    %v1002 = vld [vmem:[%s988 + $0x34] sm:$0xf]
    %v1003 = vld [vmem:[%s988 + $0x38] sm:$0xf]
    %v1004 = vld [vmem:[%s988 + $0x3c] sm:$0xf]
    %v1006 = vunpack.c.l.b16 %v987
    %v1007 = vpack.c.b16 %v740, %v1006
    %v1008 = vrot.slane %v1007, 1
    %v1009 = vrot.slane %v745, 1
    %v1010 = vsel %vm482, %v1008, %v1009
    %v1011 = vrot.slane %v746, 1
    %v1012 = vsel %vm482, %v1009, %v1011
    %v1032 = vunpack.c.l.b16 %v989
    %v1033 = vunpack.c.l.b16 %v990
    %v1034 = vunpack.c.l.b16 %v991
    %v1035 = vunpack.c.l.b16 %v992
    %v1036 = vunpack.c.l.b16 %v993
    %v1037 = vunpack.c.l.b16 %v994
    %v1038 = vunpack.c.l.b16 %v995
    %v1039 = vunpack.c.l.b16 %v996
    %v1040 = vunpack.c.l.b16 %v997
    %v1041 = vunpack.c.l.b16 %v998
    %v1042 = vunpack.c.l.b16 %v999
    %v1043 = vunpack.c.l.b16 %v1000
    %v1044 = vunpack.c.l.b16 %v1001
    %v1045 = vunpack.c.l.b16 %v1002
    %v1046 = vunpack.c.l.b16 %v1003
    %v1047 = vunpack.c.l.b16 %v1004
    %v1048 = vpack.c.b16 %v1033, %v1032
    %v1049 = vpack.c.b16 %v1035, %v1034
    %v1050 = vpack.c.b16 %v1037, %v1036
    %v1051 = vpack.c.b16 %v1039, %v1038
    %v1052 = vpack.c.b16 %v1041, %v1040
    %v1053 = vpack.c.b16 %v1043, %v1042
    %v1054 = vpack.c.b16 %v1045, %v1044
    %v1055 = vpack.c.b16 %v1047, %v1046
    %1064 = vmatprep.subr.bf16.mxu0 0
    %1065 = vmatpush1.bf16.msra.mxu0 %v1048
    %1066 = vmatprep.subr.bf16.mxu0 0
    %1067 = vmatpush1.bf16.msra.mxu0 %v1049
    %1068 = vmatprep.subr.bf16.mxu0 0
    %1069 = vmatpush1.bf16.msra.mxu0 %v1050
    %1070 = vmatprep.subr.bf16.mxu0 0
    %1071 = vmatpush1.bf16.msra.mxu0 %v1051
    %1072 = vmatprep.subr.bf16.mxu0 0
    %1073 = vmatpush1.bf16.msra.mxu0 %v1052
    %1074 = vmatprep.subr.bf16.mxu0 0
    %1075 = vmatpush1.bf16.msra.mxu0 %v1053
    %1076 = vmatprep.subr.bf16.mxu0 0
    %1077 = vmatpush1.bf16.msra.mxu0 %v1054
    %1078 = vmatprep.subr.bf16.mxu0 0
    %1079 = vmatpush1.bf16.msra.mxu0 %v1055
    %1080 = vmatprep.subr.bf16.mxu0 0
    %1081 = vmatpush1.bf16.msra.mxu0 0
    %1082 = vmatprep.subr.bf16.mxu0 0
    %1083 = vmatpush1.bf16.msra.mxu0 0
    %1084 = vmatprep.subr.bf16.mxu0 0
    %1085 = vmatpush1.bf16.msra.mxu0 0
    %1086 = vmatprep.subr.bf16.mxu0 0
    %1087 = vmatpush1.bf16.msra.mxu0 0
    %1088 = vmatprep.subr.bf16.mxu0 0
    %1089 = vmatpush1.bf16.msra.mxu0 0
    %1090 = vmatprep.subr.bf16.mxu0 0
    %1091 = vmatpush1.bf16.msra.mxu0 0
    %1092 = vmatprep.subr.bf16.mxu0 0
    %1093 = vmatpush1.bf16.msra.mxu0 0
    %1094 = vmatprep.subr.bf16.mxu0 0
    %1095 = vmatpush1.bf16.msra.mxu0 0
    %1096 = vmatprep.mubr.bf16.mxu0 0
    %1097 = vmatmul.mubr.bf16.gmra.mrb[0].mxu0 %v1010
    %v1098 = vpop.f32.mrb[0].mxu0
    %v1099 = vadd.f32 0.0, %v1098
    %v1100 = vpop.f32.mrb[0].mxu0
    %v1101 = vpop.f32.mrb[0].mxu0
    %v1102 = vadd.f32 0.0, %v1101
    %v1103 = vpop.f32.mrb[0].mxu0
    %1104 = vmatprep.mubr.bf16.mxu0 0
    %1105 = vmatmul.mubr.bf16.gmra.mrb[0].mxu0 %v1012
    %v1106 = vpop.f32.mrb[0].mxu0
    %v1107 = vadd.f32 0.0, %v1106
    %v1108 = vpop.f32.mrb[0].mxu0
    %v1109 = vpop.f32.mrb[0].mxu0
    %v1110 = vadd.f32 0.0, %v1109
    %v1111 = vpop.f32.mrb[0].mxu0
    %1112 = vmatprep.mubr.bf16.mxu0 0
    %1113 = vmatmul.mubr.bf16.gmra.mrb[0].mxu0 %v1011
    %v1114 = vpop.f32.mrb[0].mxu0
    %v1115 = vadd.f32 0.0, %v1114
    %v1116 = vpop.f32.mrb[0].mxu0
    %v1117 = vpop.f32.mrb[0].mxu0
    %v1118 = vpop.f32.mrb[0].mxu0
    %1119 = vdwg.mxu0
    %v1120 = vadd.f32 %v966, %v1099
    %v1121 = vadd.f32 %v969, %v1102
    %v1122 = vadd.f32 %v974, %v1107
    %v1123 = vadd.f32 %v977, %v1110
    %v1124 = vadd.f32 %v982, %v1115
    %v1125 = vld [vmem:[%s4] sm:$0x1]
    %v1127 = vlaneseq
    %v1128 = vshrl.u32 %v1127, 7
    %v1129 = vsub.s32 0, %v1128
    %v1130 = vrot.slane %v1125, %v1129
    %v1132 = vadd.f32 %v1120, %v1130
    %v1133 = vadd.f32 %v1121, %v1130
    %v1134 = vld [vmem:[#allocation3] sm:$0xff]
    %v1135 = vld [vmem:[#allocation3 + $0x8] sm:$0xff]
    %v1136 = vadd.f32 %v1132, %v1134
    %v1137 = vadd.f32 %v1133, %v1135
    %v1138 = vmax.f32 %v1136, 0.0
    %v1139 = vmax.f32 %v1137, 0.0
    %1140 = vst [vmem:[#allocation9] sm:$0xff] %v1138
    %1141 = vst [vmem:[#allocation9 + $0x8] sm:$0xff] %v1139
    %v1142 = vadd.f32 %v1122, %v1130
    %v1143 = vadd.f32 %v1123, %v1130
    %v1144 = vadd.f32 %v1124, %v1130
    %v1145 = vld [vmem:[%s124] sm:$0xff]
    %v1146 = vld [vmem:[%s124 + $0x8] sm:$0xff]
    %vm1149 = vcmask 1041408
    %v1150 = vrot.slane %v1145, 6
    %v1151 = vrot.slane %v1146, 6
    %v1152 = vsel %vm1149, %v1150, %v1151
    %v1156 = vadd.f32 %v1142, %v1150
    %v1157 = vadd.f32 %v1143, %v1152
    %v1158 = vadd.f32 %v1144, %v1151
    %v1159 = vmax.f32 %v1156, 0.0
    %v1160 = vmax.f32 %v1157, 0.0
    %v1161 = vmax.f32 %v1158, 0.0
    %s1162 = scalar_lea.vmem [#allocation9], 16
    %1163 = vst [vmem:[%s1162 - $0x2] sm:$0xfc] %v1159
    %1164 = vst [vmem:[%s1162 + $0x6] sm:$0xff] %v1160
    %1165 = vst [vmem:[%s1162 + $0xe] sm:$0x3] %v1161
    // Predicated region
    $region34: #{res_block_forward_packed.1} parent=1 // pred_check
      _
    $region35: #{res_block_forward_packed.1} parent=1 // pred_check_branch
      %1167 = sbr.rel (0) target = $region37
    $region36: #{res_block_forward_packed.1} parent=1 // pred_region
      %s1169 = ssub.s32 512, 512
      %1170 = vsyncadd [#allocation5], %s1169
      %s1171 = sshll.u32 [#allocation9], 4
      %s1172 = int_to_ptr.vmem [resolvable:$true] %s1171
      %1177 = dma.vmem_to_hbm [thread:$0]  %s1172, 512, %s5, [#allocation5], 128, 128, 8
    $region37: #{res_block_forward_packed.1} parent=1 // pred_fallthru
      _
    // Predicated region
    $region38: #{res_block_forward_packed.1} parent=1 // pred_check
      _
    $region39: #{res_block_forward_packed.1} parent=1 // pred_check_branch
      %1179 = sbr.rel (0) target = $region41
    $region40: #{res_block_forward_packed.1} parent=1 // pred_region
      %1180 = dma.done [#allocation5], 512
    $region41: #{res_block_forward_packed.1} parent=1 // pred_fallthru
      _
    %1181 = vsyncpa [#allocation4], 1
    %1182 = vsyncpa [#allocation7], 1
    %1183 = vsyncpa [#allocation5], 1

</llo_original>
